<compile_context>
chip_gen: v6e
topology: v6e:2x2x1
jax: 0.10.0
libtpu: 0.0.40
codegen_flags: <defaults>
</compile_context>

<pallas_src>
from functools import partial

import jax
import jax.numpy as jnp
import numpy as np
from jax.experimental import pallas as pl
from jax.experimental.pallas import tpu as pltpu


# ----------------------------- Pallas kernel -----------------------------

def _dilated_residual_kernel(x_ref, wd_ref, bd_ref, w1_ref, b1_ref, o_ref,
                             *, dilation, seq_len, compute_dtype):
    d = dilation
    T = seq_len

    x_pad = x_ref[0]                       # (F, T + 2d), input dtype (f32)
    x_center = x_pad[:, d:d + T]           # original x -> residual term

    # Dilated k=3 conv: three accumulating (F, F) @ (F, T) matmuls on static
    # windows of the pre-padded block (no roll / concat / masking needed).
    acc = None
    for k in range(3):                     # k*d and T are Python constants
        win = x_pad[:, k * d:k * d + T].astype(compute_dtype)
        part = jnp.dot(wd_ref[k], win, preferred_element_type=jnp.float32)
        acc = part if acc is None else acc + part
    h = jnp.maximum(acc + bd_ref[...], 0.0)          # bias + ReLU in f32

    # TODO(synk): nn.Dropout(0.3) omitted — identity at inference/eval time.

    # 1x1 conv + residual (residual math stays f32).
    h = jnp.dot(w1_ref[...], h.astype(compute_dtype),
                preferred_element_type=jnp.float32) + b1_ref[...]
    o_ref[0, :, :] = (h + x_center.astype(jnp.float32)).astype(o_ref.dtype)


def dilated_residual_layer(x, wd, bd, w1, b1, dilation, *,
                           use_bf16=True, out_dtype=None):
    """DilatedResidualLayer forward (inference).

    x:  (N, F, T) activations, PyTorch NCT layout (time on lanes).
    wd: (3, F, F) dilated taps, wd[k, co, ci] = conv_dilated.weight[co, ci, k]
    bd: (F, 1)    conv_dilated.bias
    w1: (F, F)    w1[co, ci] = conv_1x1.weight[co, ci, 0]
    b1: (F, 1)    conv_1x1.bias
    """
    N, F, T = x.shape
    d = int(dilation)
    assert d >= 1
    assert wd.shape == (3, F, F) and w1.shape == (F, F)
    assert bd.shape == (F, 1) and b1.shape == (F, 1)

    out_dtype = x.dtype if out_dtype is None else out_dtype
    compute_dtype = jnp.bfloat16 if use_bf16 else jnp.float32

    # Halo handling done once in HBM: cheap XLA pad, static windows in-kernel.
    x_pad = jnp.pad(x, ((0, 0), (0, 0), (d, d)))
    Tp = T + 2 * d

    wd_c = wd.astype(compute_dtype)
    w1_c = w1.astype(compute_dtype)
    bd_f = bd.astype(jnp.float32)
    b1_f = b1.astype(jnp.float32)

    # Scheduler hint: 4 (F,F) matmuls per output frame (3 taps + 1x1 conv).
    flops = 2 * N * T * F * F * 4
    bytes_accessed = (x_pad.size * x_pad.dtype.itemsize
                      + N * F * T * jnp.dtype(out_dtype).itemsize
                      + wd_c.size * wd_c.dtype.itemsize
                      + w1_c.size * w1_c.dtype.itemsize
                      + (bd_f.size + b1_f.size) * 4)
    cost = pl.CostEstimate(flops=flops, transcendentals=0,
                           bytes_accessed=bytes_accessed)

    # VMEM budget: double-buffered in/out blocks + a few activation-sized
    # temporaries per step.  Clamp to v7x's 64 MiB physical VMEM.
    block_bytes = F * Tp * 4
    vmem_limit = int(min(64 << 20, max(32 << 20, 16 * block_bytes)))

    kernel = partial(_dilated_residual_kernel, dilation=d, seq_len=T,
                     compute_dtype=compute_dtype)

    # Grid over batch only: one (1, F, T+2d) block easily fits VMEM for
    # typical MSTCN shapes (T up to a few thousand frames, F = 32..256).
    # TODO(synk): for extremely long sequences, split T wrapper-side into
    # independent d-halo chunks (overlapping halo windows are not expressible
    # with plain Blocked BlockSpec index maps).
    return pl.pallas_call(
        kernel,
        out_shape=jax.ShapeDtypeStruct((N, F, T), out_dtype),
        grid=(N,),
        in_specs=[
            pl.BlockSpec((1, F, Tp), lambda n: (n, 0, 0)),
            pl.BlockSpec((3, F, F), lambda n: (0, 0, 0)),
            pl.BlockSpec((F, 1), lambda n: (0, 0)),
            pl.BlockSpec((F, F), lambda n: (0, 0)),
            pl.BlockSpec((F, 1), lambda n: (0, 0)),
        ],
        out_specs=pl.BlockSpec((1, F, T), lambda n: (n, 0, 0)),
        compiler_params=pltpu.CompilerParams(
            dimension_semantics=("parallel",),
            vmem_limit_bytes=vmem_limit),
        cost_estimate=cost,
    )(x_pad, wd_c, bd_f, w1_c, b1_f)


# ----------------------- PyTorch-layout param helper -----------------------

def params_from_torch_layout(w_dilated, b_dilated, w_1x1, b_1x1):
    """Convert PyTorch Conv1d params (Cout, Cin, K) to the kernel layout."""
    F = w_dilated.shape[0]
    wd = jnp.transpose(w_dilated, (2, 0, 1))      # (3, Cout, Cin)
    bd = b_dilated.reshape(F, 1)
    w1 = w_1x1[:, :, 0]                           # (Cout, Cin)
    b1 = b_1x1.reshape(F, 1)
    return wd, bd, w1, b1


# ----------------------------- pure-JAX reference -----------------------------

def ref_dilated_residual(x, w_dilated, b_dilated, w_1x1, b_1x1, d):
    """Independent reference with XLA convs, PyTorch Conv1d semantics."""
    dn = ('NCH', 'OIH', 'NCH')
    h = jax.lax.conv_general_dilated(x, w_dilated, window_strides=(1,),
                                     padding=[(d, d)], rhs_dilation=(d,),
                                     dimension_numbers=dn)
    h = jnp.maximum(h + b_dilated[None, :, None], 0.0)
    h = jax.lax.conv_general_dilated(h, w_1x1, window_strides=(1,),
                                     padding=[(0, 0)], dimension_numbers=dn)
    return h + b_1x1[None, :, None] + x


# ----------------------------- main -----------------------------

if __name__ == "__main__":
    N, F, T = 2, 32, 16      # batch=2, num_filters=32, seq=16 (PyTorch NCT)

    key = jax.random.PRNGKey(0)
    kx, kw0, kb0, kw1, kb1 = jax.random.split(key, 5)
    x = jax.random.normal(kx, (N, F, T), jnp.float32)
    # Conv1d params in PyTorch (Cout, Cin, K) layout.
    w_dilated = 0.1 * jax.random.normal(kw0, (F, F, 3), jnp.float32)
    b_dilated = 0.1 * jax.random.normal(kb0, (F,), jnp.float32)
    w_1x1 = 0.1 * jax.random.normal(kw1, (F, F, 1), jnp.float32)
    b_1x1 = 0.1 * jax.random.normal(kb1, (F,), jnp.float32)

    wd, bd, w1, b1 = params_from_torch_layout(w_dilated, b_dilated, w_1x1, b_1x1)

    for d in (1, 2, 4):                   # MSTCN uses dilation = 2**layer
        ref = ref_dilated_residual(x, w_dilated, b_dilated, w_1x1, b_1x1, d)

        # bf16 MXU operands (v6e / v7x default).
        out = jax.block_until_ready(
            dilated_residual_layer(x, wd, bd, w1, b1, d, use_bf16=True))
        assert out.shape == (N, F, T)
        np.testing.assert_allclose(np.asarray(out), np.asarray(ref),
                                   rtol=2e-2, atol=2e-2)

        # pure-f32 variant (preferred on v5e: no bf16 VPU path there).
        out32 = jax.block_until_ready(
            dilated_residual_layer(x, wd, bd, w1, b1, d, use_bf16=False))
        np.testing.assert_allclose(np.asarray(out32), np.asarray(ref),
                                   rtol=1e-4, atol=1e-4)

    print("KERNEL_OK")
</pallas_src>

<mosaic_0001>
module attributes {stable_mosaic.version = 11 : i64} {
  func.func @_dilated_residual_kernel(%arg0: i32, %arg1: memref<1x32x18xf32, #tpu.memory_space<vmem>>, %arg2: memref<3x32x32xbf16, #tpu.memory_space<vmem>>, %arg3: memref<32x1xf32, #tpu.memory_space<vmem>>, %arg4: memref<32x32xbf16, #tpu.memory_space<vmem>>, %arg5: memref<32x1xf32, #tpu.memory_space<vmem>>, %arg6: memref<1x32x16xf32, #tpu.memory_space<vmem>>) attributes {dimension_semantics = [#tpu.dimension_semantics<parallel>], iteration_bounds = array<i64: 2>, scalar_prefetch = 0 : i64, scratch_operands = 0 : i64, tpu.core_type = #tpu.core_type<tc>, window_params = [{transform_indices = @transform_0, window_bounds = array<i64: 1, 32, 18>}, {pipeline_mode = #tpu.pipeline_mode<synchronous>, transform_indices = @transform_1, window_bounds = array<i64: 3, 32, 32>}, {pipeline_mode = #tpu.pipeline_mode<synchronous>, transform_indices = @transform_2, window_bounds = array<i64: 32, 1>}, {pipeline_mode = #tpu.pipeline_mode<synchronous>, transform_indices = @transform_3, window_bounds = array<i64: 32, 32>}, {pipeline_mode = #tpu.pipeline_mode<synchronous>, transform_indices = @transform_4, window_bounds = array<i64: 32, 1>}, {transform_indices = @transform_5, window_bounds = array<i64: 1, 32, 16>}]} {
    %c0 = arith.constant 0 : index
    %c0_0 = arith.constant 0 : index
    %c0_1 = arith.constant 0 : index
    %0 = vector.load %arg1[%c0, %c0_0, %c0_1] : memref<1x32x18xf32, #tpu.memory_space<vmem>>, vector<1x32x18xf32>
    %1 = vector.shape_cast %0 : vector<1x32x18xf32> to vector<32x18xf32>
    %2 = vector.extract_strided_slice %1 {offsets = [0, 1], sizes = [32, 16], strides = [1, 1]} : vector<32x18xf32> to vector<32x16xf32>
    %3 = vector.extract_strided_slice %1 {offsets = [0, 0], sizes = [32, 16], strides = [1, 1]} : vector<32x18xf32> to vector<32x16xf32>
    %4 = arith.truncf %3 : vector<32x16xf32> to vector<32x16xbf16>
    %c0_2 = arith.constant 0 : index
    %c0_3 = arith.constant 0 : index
    %c0_4 = arith.constant 0 : index
    %5 = vector.load %arg2[%c0_2, %c0_3, %c0_4] : memref<3x32x32xbf16, #tpu.memory_space<vmem>>, vector<1x32x32xbf16>
    %6 = vector.shape_cast %5 : vector<1x32x32xbf16> to vector<32x32xbf16>
    %cst = arith.constant dense<0.000000e+00> : vector<32x16xf32>
    %7 = tpu.matmul %6, %4, %cst {dimension_numbers = #tpu.dot_dimension_numbers<[1], [0], [0], [1], [0, 0, 1, 1], [], []>} : vector<32x32xbf16>, vector<32x16xbf16>, vector<32x16xf32> -> vector<32x16xf32>
    %8 = vector.extract_strided_slice %1 {offsets = [0, 1], sizes = [32, 16], strides = [1, 1]} : vector<32x18xf32> to vector<32x16xf32>
    %9 = arith.truncf %8 : vector<32x16xf32> to vector<32x16xbf16>
    %c1 = arith.constant 1 : index
    %c0_5 = arith.constant 0 : index
    %c0_6 = arith.constant 0 : index
    %10 = vector.load %arg2[%c1, %c0_5, %c0_6] : memref<3x32x32xbf16, #tpu.memory_space<vmem>>, vector<1x32x32xbf16>
    %11 = vector.shape_cast %10 : vector<1x32x32xbf16> to vector<32x32xbf16>
    %cst_7 = arith.constant dense<0.000000e+00> : vector<32x16xf32>
    %12 = tpu.matmul %11, %9, %cst_7 {dimension_numbers = #tpu.dot_dimension_numbers<[1], [0], [0], [1], [0, 0, 1, 1], [], []>} : vector<32x32xbf16>, vector<32x16xbf16>, vector<32x16xf32> -> vector<32x16xf32>
    %13 = arith.addf %7, %12 : vector<32x16xf32>
    %14 = vector.extract_strided_slice %1 {offsets = [0, 2], sizes = [32, 16], strides = [1, 1]} : vector<32x18xf32> to vector<32x16xf32>
    %15 = arith.truncf %14 : vector<32x16xf32> to vector<32x16xbf16>
    %c2 = arith.constant 2 : index
    %c0_8 = arith.constant 0 : index
    %c0_9 = arith.constant 0 : index
    %16 = vector.load %arg2[%c2, %c0_8, %c0_9] : memref<3x32x32xbf16, #tpu.memory_space<vmem>>, vector<1x32x32xbf16>
    %17 = vector.shape_cast %16 : vector<1x32x32xbf16> to vector<32x32xbf16>
    %cst_10 = arith.constant dense<0.000000e+00> : vector<32x16xf32>
    %18 = tpu.matmul %17, %15, %cst_10 {dimension_numbers = #tpu.dot_dimension_numbers<[1], [0], [0], [1], [0, 0, 1, 1], [], []>} : vector<32x32xbf16>, vector<32x16xbf16>, vector<32x16xf32> -> vector<32x16xf32>
    %19 = arith.addf %13, %18 : vector<32x16xf32>
    %c0_11 = arith.constant 0 : index
    %c0_12 = arith.constant 0 : index
    %20 = vector.load %arg3[%c0_11, %c0_12] : memref<32x1xf32, #tpu.memory_space<vmem>>, vector<32x1xf32>
    %21 = vector.broadcast %20 : vector<32x1xf32> to vector<32x16xf32>
    %22 = arith.addf %19, %21 : vector<32x16xf32>
    %cst_13 = arith.constant 0.000000e+00 : f32
    %23 = vector.broadcast %cst_13 : f32 to vector<32x16xf32>
    %24 = arith.maximumf %22, %23 : vector<32x16xf32>
    %c0_14 = arith.constant 0 : index
    %c0_15 = arith.constant 0 : index
    %25 = vector.load %arg4[%c0_14, %c0_15] : memref<32x32xbf16, #tpu.memory_space<vmem>>, vector<32x32xbf16>
    %26 = arith.truncf %24 : vector<32x16xf32> to vector<32x16xbf16>
    %cst_16 = arith.constant dense<0.000000e+00> : vector<32x16xf32>
    %27 = tpu.matmul %25, %26, %cst_16 {dimension_numbers = #tpu.dot_dimension_numbers<[1], [0], [0], [1], [0, 0, 1, 1], [], []>} : vector<32x32xbf16>, vector<32x16xbf16>, vector<32x16xf32> -> vector<32x16xf32>
    %c0_17 = arith.constant 0 : index
    %c0_18 = arith.constant 0 : index
    %28 = vector.load %arg5[%c0_17, %c0_18] : memref<32x1xf32, #tpu.memory_space<vmem>>, vector<32x1xf32>
    %29 = vector.broadcast %28 : vector<32x1xf32> to vector<32x16xf32>
    %30 = arith.addf %27, %29 : vector<32x16xf32>
    %31 = arith.addf %30, %2 : vector<32x16xf32>
    %c0_19 = arith.constant 0 : index
    %c0_20 = arith.constant 0 : index
    %c0_21 = arith.constant 0 : index
    %32 = vector.load %arg6[%c0_19, %c0_20, %c0_21] : memref<1x32x16xf32, #tpu.memory_space<vmem>>, vector<1x32x16xf32>
    %33 = vector.shape_cast %32 : vector<1x32x16xf32> to vector<32x16xf32>
    %34 = vector.shape_cast %31 : vector<32x16xf32> to vector<1x32x16xf32>
    tpu.vector_store %arg6[%c0_19, %c0_20, %c0_21], %34 {strides = array<i32>} : memref<1x32x16xf32, #tpu.memory_space<vmem>>, vector<1x32x16xf32>,
    return
  }
  func.func @transform_0(%arg0: i32) -> (i32, i32, i32) {
    %c0_i32 = arith.constant 0 : i32
    %c0_i32_0 = arith.constant 0 : i32
    %c0_i32_1 = arith.constant 0 : i32
    return %arg0, %c0_i32, %c0_i32_0 : i32, i32, i32
  }
  func.func @transform_1(%arg0: i32) -> (i32, i32, i32) {
    %c0_i32 = arith.constant 0 : i32
    %c0_i32_0 = arith.constant 0 : i32
    %c0_i32_1 = arith.constant 0 : i32
    %c0_i32_2 = arith.constant 0 : i32
    return %c0_i32, %c0_i32_0, %c0_i32_1 : i32, i32, i32
  }
  func.func @transform_2(%arg0: i32) -> (i32, i32) {
    %c0_i32 = arith.constant 0 : i32
    %c0_i32_0 = arith.constant 0 : i32
    %c0_i32_1 = arith.constant 0 : i32
    return %c0_i32, %c0_i32_0 : i32, i32
  }
  func.func @transform_3(%arg0: i32) -> (i32, i32) {
    %c0_i32 = arith.constant 0 : i32
    %c0_i32_0 = arith.constant 0 : i32
    %c0_i32_1 = arith.constant 0 : i32
    return %c0_i32, %c0_i32_0 : i32, i32
  }
  func.func @transform_4(%arg0: i32) -> (i32, i32) {
    %c0_i32 = arith.constant 0 : i32
    %c0_i32_0 = arith.constant 0 : i32
    %c0_i32_1 = arith.constant 0 : i32
    return %c0_i32, %c0_i32_0 : i32, i32
  }
  func.func @transform_5(%arg0: i32) -> (i32, i32, i32) {
    %c0_i32 = arith.constant 0 : i32
    %c0_i32_0 = arith.constant 0 : i32
    %c0_i32_1 = arith.constant 0 : i32
    return %arg0, %c0_i32, %c0_i32_0 : i32, i32, i32
  }
}

</mosaic_0001>

<llo_original>
// kernel: tpu_custom_call.1
$region0: #{tpu_custom_call.1}
  #allocation0 [shape = 'u32[]', space=smem, size = 0x4, offset = 0x4, fixed_abs, tag = 'smem constant byte address 0x4 - core index']
  #allocation1 [shape = 'u32[144,128]{1,0:T(1,128)}', space=vmem, size = 0x12000, scoped, tag = 'internal scratch']
  %s0 = inlined_call_operand.vmem [shape: f32[2,32,18], index: 0, kind: input, shape index: {}]
  %s1 = inlined_call_operand.vmem [shape: bf16[3,32,32], index: 1, kind: input, shape index: {}]
  %s2 = inlined_call_operand.vmem [shape: f32[32,1], index: 2, kind: input, shape index: {}]
  %s3 = inlined_call_operand.vmem [shape: bf16[32,32], index: 3, kind: input, shape index: {}]
  %s4 = inlined_call_operand.vmem [shape: f32[32,1], index: 4, kind: input, shape index: {}]
  %s5 = inlined_call_operand.vmem [shape: f32[2,32,16], index: 5, kind: output, shape index: {}]
  %s6 = sld [smem:[#allocation0]]
  $region53: #{tpu_custom_call.1} parent=0
    _
  %s8 = ssub.s32 1, %s6
  %s9 = scalar_select 0, %s8, %s6
  loop: start=0, step=1, limit=4
  $region2: #{tpu_custom_call.1} parent=0 // loop_pre_header
    _
  $region3: #{tpu_custom_call.1} parent=0 // loop_header
    %s11 = sphi 0, %s15
    %p12 = scmp.ge.s32.totalorder %s11, 4
    %s21 = sphi 0, %s23
    %s24 = sphi 0, %s21
    %s25 = sphi 0, %s24
    %s41 = sphi 0, %s25
    %s45 = sphi 0, %s45
    %s47 = sphi 0, %s45
    %s48 = sphi 0, %s47
    %s62 = sphi 0, %s48
    %s66 = sphi 0, %s66
    %s68 = sphi 0, %s66
    %s69 = sphi 0, %s68
    %s83 = sphi 0, %s69
    %s87 = sphi 0, %s87
    %s89 = sphi 0, %s87
    %s90 = sphi 0, %s89
    %s104 = sphi 0, %s90
    %s108 = sphi 0, %s108
    %s110 = sphi 0, %s108
    %s111 = sphi 0, %s110
    %s125 = sphi 0, %s111
    %s131 = sphi 0, %s133
    %s134 = sphi 0, %s131
    %s135 = sphi 0, %s134
    %s151 = sphi 0, %s135
  $region4: #{tpu_custom_call.1} parent=0 // loop_header_branch
    %14 = sbr.rel (%p12) target = $region8
  $region5: #{tpu_custom_call.1} parent=0 // loop_body
    %s16 = ssub.s32 %s11, 1
    %s17 = ssub.s32 %s11, 2
    %s18 = sadd.s32 %s11, 1
    %s19 = ssub.s32 %s11, %s18
    %p20 = scmp.eq.s32.totalorder %s19, 0
    %s22 = sadd.s32 %s21, 1
    %s23 = scalar_select %p20, %s21, %s22
    %p26 = pneg %p20
    %p27 = scmp.eq.s32.totalorder %s11, 1
    %p28 = por %p26, %p27
    %p29 = scmp.ne.s32.totalorder %s21, %s24
    %p30 = scmp.eq.s32.totalorder %s11, 0
    %p31 = por %p29, %p30
    %p32 = scmp.ne.s32.totalorder %s21, %s24
    %p33 = scmp.eq.s32.totalorder %s16, 1
    %p34 = por %p32, %p33
    %p35 = scmp.ne.s32.totalorder %s24, %s25
    %p36 = scmp.eq.s32.totalorder %s16, 0
    %p37 = por %p35, %p36
    %p38 = scmp.ne.s32.totalorder %s24, %s25
    %p39 = scmp.eq.s32.totalorder %s17, 1
    %p40 = por %p38, %p39
    %p42 = scmp.ne.s32.totalorder %s25, %s41
    %p43 = scmp.eq.s32.totalorder %s17, 0
    %p44 = por %p42, %p43
    %s46 = sadd.s32 %s45, 1
    %p49 = scmp.eq.s32.totalorder %s11, 1
    %p50 = scmp.ne.s32.totalorder %s45, %s47
    %p51 = scmp.eq.s32.totalorder %s11, 0
    %p52 = por %p50, %p51
    %p53 = scmp.ne.s32.totalorder %s45, %s47
    %p54 = scmp.eq.s32.totalorder %s16, 1
    %p55 = por %p53, %p54
    %p56 = scmp.ne.s32.totalorder %s47, %s48
    %p57 = scmp.eq.s32.totalorder %s16, 0
    %p58 = por %p56, %p57
    %p59 = scmp.ne.s32.totalorder %s47, %s48
    %p60 = scmp.eq.s32.totalorder %s17, 1
    %p61 = por %p59, %p60
    %p63 = scmp.ne.s32.totalorder %s48, %s62
    %p64 = scmp.eq.s32.totalorder %s17, 0
    %p65 = por %p63, %p64
    %s67 = sadd.s32 %s66, 1
    %p70 = scmp.eq.s32.totalorder %s11, 1
    %p71 = scmp.ne.s32.totalorder %s66, %s68
    %p72 = scmp.eq.s32.totalorder %s11, 0
    %p73 = por %p71, %p72
    %p74 = scmp.ne.s32.totalorder %s66, %s68
    %p75 = scmp.eq.s32.totalorder %s16, 1
    %p76 = por %p74, %p75
    %p77 = scmp.ne.s32.totalorder %s68, %s69
    %p78 = scmp.eq.s32.totalorder %s16, 0
    %p79 = por %p77, %p78
    %p80 = scmp.ne.s32.totalorder %s68, %s69
    %p81 = scmp.eq.s32.totalorder %s17, 1
    %p82 = por %p80, %p81
    %p84 = scmp.ne.s32.totalorder %s69, %s83
    %p85 = scmp.eq.s32.totalorder %s17, 0
    %p86 = por %p84, %p85
    %s88 = sadd.s32 %s87, 1
    %p91 = scmp.eq.s32.totalorder %s11, 1
    %p92 = scmp.ne.s32.totalorder %s87, %s89
    %p93 = scmp.eq.s32.totalorder %s11, 0
    %p94 = por %p92, %p93
    %p95 = scmp.ne.s32.totalorder %s87, %s89
    %p96 = scmp.eq.s32.totalorder %s16, 1
    %p97 = por %p95, %p96
    %p98 = scmp.ne.s32.totalorder %s89, %s90
    %p99 = scmp.eq.s32.totalorder %s16, 0
    %p100 = por %p98, %p99
    %p101 = scmp.ne.s32.totalorder %s89, %s90
    %p102 = scmp.eq.s32.totalorder %s17, 1
    %p103 = por %p101, %p102
    %p105 = scmp.ne.s32.totalorder %s90, %s104
    %p106 = scmp.eq.s32.totalorder %s17, 0
    %p107 = por %p105, %p106
    %s109 = sadd.s32 %s108, 1
    %p112 = scmp.eq.s32.totalorder %s11, 1
    %p113 = scmp.ne.s32.totalorder %s108, %s110
    %p114 = scmp.eq.s32.totalorder %s11, 0
    %p115 = por %p113, %p114
    %p116 = scmp.ne.s32.totalorder %s108, %s110
    %p117 = scmp.eq.s32.totalorder %s16, 1
    %p118 = por %p116, %p117
    %p119 = scmp.ne.s32.totalorder %s110, %s111
    %p120 = scmp.eq.s32.totalorder %s16, 0
    %p121 = por %p119, %p120
    %p122 = scmp.ne.s32.totalorder %s110, %s111
    %p123 = scmp.eq.s32.totalorder %s17, 1
    %p124 = por %p122, %p123
    %p126 = scmp.ne.s32.totalorder %s111, %s125
    %p127 = scmp.eq.s32.totalorder %s17, 0
    %p128 = por %p126, %p127
    %s129 = ssub.s32 %s11, %s18
    %p130 = scmp.eq.s32.totalorder %s129, 0
    %s132 = sadd.s32 %s131, 1
    %s133 = scalar_select %p130, %s131, %s132
    %p136 = pneg %p130
    %p137 = scmp.eq.s32.totalorder %s11, 1
    %p138 = por %p136, %p137
    %p139 = scmp.ne.s32.totalorder %s131, %s134
    %p140 = scmp.eq.s32.totalorder %s11, 0
    %p141 = por %p139, %p140
    %p142 = scmp.ne.s32.totalorder %s131, %s134
    %p143 = scmp.eq.s32.totalorder %s16, 1
    %p144 = por %p142, %p143
    %p145 = scmp.ne.s32.totalorder %s134, %s135
    %p146 = scmp.eq.s32.totalorder %s16, 0
    %p147 = por %p145, %p146
    %p148 = scmp.ne.s32.totalorder %s134, %s135
    %p149 = scmp.eq.s32.totalorder %s17, 1
    %p150 = por %p148, %p149
    %p152 = scmp.ne.s32.totalorder %s135, %s151
    %p153 = scmp.eq.s32.totalorder %s17, 0
    %p154 = por %p152, %p153
    %p155 = scmp.le.s32.totalorder 1, %s11
    %p156 = scmp.lt.s32.totalorder %s11, 3
    %p157 = pnand %p155, %p156
    %p158 = pneg %p157
    // Predicated region
    $region9: #{tpu_custom_call.1} parent=5 // pred_check
      _
    $region10: #{tpu_custom_call.1} parent=5 // pred_check_branch
      %160 = sbr.rel (%p157) target = $region12
    $region11: #{tpu_custom_call.1} parent=5 // pred_region
      %s161 = ssub.s32 %s11, 1
      // Predicated region
      $region13: #{tpu_custom_call.1} parent=11 // pred_check
        %p162 = pneg %p58
      $region14: #{tpu_custom_call.1} parent=11 // pred_check_branch
        %164 = sbr.rel (%p162) target = $region16
      $region15: #{tpu_custom_call.1} parent=11 // pred_region
        _
      $region16: #{tpu_custom_call.1} parent=11 // pred_fallthru
        _
      // Predicated region
      $region17: #{tpu_custom_call.1} parent=11 // pred_check
        %p165 = pneg %p79
      $region18: #{tpu_custom_call.1} parent=11 // pred_check_branch
        %167 = sbr.rel (%p165) target = $region20
      $region19: #{tpu_custom_call.1} parent=11 // pred_region
        _
      $region20: #{tpu_custom_call.1} parent=11 // pred_fallthru
        _
      // Predicated region
      $region21: #{tpu_custom_call.1} parent=11 // pred_check
        %p168 = pneg %p100
      $region22: #{tpu_custom_call.1} parent=11 // pred_check_branch
        %170 = sbr.rel (%p168) target = $region24
      $region23: #{tpu_custom_call.1} parent=11 // pred_region
        _
      $region24: #{tpu_custom_call.1} parent=11 // pred_fallthru
        _
      // Predicated region
      $region25: #{tpu_custom_call.1} parent=11 // pred_check
        %p171 = pneg %p121
      $region26: #{tpu_custom_call.1} parent=11 // pred_check_branch
        %173 = sbr.rel (%p171) target = $region28
      $region27: #{tpu_custom_call.1} parent=11 // pred_region
        _
      $region28: #{tpu_custom_call.1} parent=11 // pred_fallthru
        _
    $region12: #{tpu_custom_call.1} parent=5 // pred_fallthru
      _
    %p174 = scmp.lt.s32.totalorder %s11, 2
    // Predicated region
    $region29: #{tpu_custom_call.1} parent=5 // pred_check
      %p175 = pneg %p174
    $region30: #{tpu_custom_call.1} parent=5 // pred_check_branch
      %177 = sbr.rel (%p175) target = $region32
    $region31: #{tpu_custom_call.1} parent=5 // pred_region
      // Predicated region
      $region33: #{tpu_custom_call.1} parent=31 // pred_check
        %p178 = pneg %p31
      $region34: #{tpu_custom_call.1} parent=31 // pred_check_branch
        %180 = sbr.rel (%p178) target = $region36
      $region35: #{tpu_custom_call.1} parent=31 // pred_region
        %p181 = scmp.lt.s32.totalorder %s11, 1
        %s182 = scalar_select %p181, %s11, 1
        %s183 = smul.addr %s182, 4
        %s184 = smul.addr %s183, 8
        %s185 = scalar_lea.vmem %s0, %s184
      $region36: #{tpu_custom_call.1} parent=31 // pred_fallthru
        _
    $region32: #{tpu_custom_call.1} parent=5 // pred_fallthru
      _
    %p186 = scmp.le.s32.totalorder 1, %s11
    %p187 = scmp.lt.s32.totalorder %s11, 3
    %p188 = pnand %p186, %p187
    %p189 = pneg %p188
    // Predicated region
    $region37: #{tpu_custom_call.1} parent=5 // pred_check
      _
    $region38: #{tpu_custom_call.1} parent=5 // pred_check_branch
      %191 = sbr.rel (%p188) target = $region40
    $region39: #{tpu_custom_call.1} parent=5 // pred_region
      %s192 = ssub.s32 %s11, 1
      %p193 = scmp.lt.s32.totalorder %s16, 1
      %s194 = scalar_select %p193, %s16, 1
      %s195 = smul.addr %s194, 4
      %s196 = smul.addr %s195, 8
      %s197 = scalar_lea.vmem %s0, %s196
      %p198 = pneg %p37
      %p199 = pneg %p34
      %p200 = pneg %p58
      %p201 = pneg %p55
      %p202 = pneg %p79
      %p203 = pneg %p76
      %p204 = pneg %p100
      %p205 = pneg %p97
      %p206 = pneg %p121
      %p207 = pneg %p118
      %p208 = pneg %p147
      %p209 = pneg %p144
      %p210 = scmp.lt.s32.totalorder %s16, 1
      %s211 = scalar_select %p210, %s16, 1
      %s212 = smul.addr %s211, 4
      %s213 = smul.addr %s212, 8
      %s214 = scalar_lea.vmem %s5, %s213
      %p215 = scmp.lt.s32.totalorder %s16, 1
      %s216 = scalar_select %p215, %s16, 1
      %s217 = smul.addr %s216, 4
      %s218 = smul.addr %s217, 8
      %s219 = scalar_lea.vmem %s0, %s218
      %p220 = scmp.lt.s32.totalorder %s16, 1
      %s221 = scalar_select %p220, %s16, 1
      %s222 = smul.addr %s221, 4
      %s223 = smul.addr %s222, 8
      %s224 = scalar_lea.vmem %s5, %s223
      %v226 = vld [vmem:[%s219] sm:$0xff]
      %v227 = vld [vmem:[%s219 + $0x8] sm:$0xff]
      %v228 = vld [vmem:[%s219 + $0x10] sm:$0xff]
      %v229 = vld [vmem:[%s219 + $0x18] sm:$0xff]
      %v230 = vpack.c.bf16 %v227, %v226
      %v231 = vpack.c.bf16 %v229, %v228
      %v232 = vld [vmem:[%s1] sm:$0xf]
      %v233 = vld [vmem:[%s1 + $0x4] sm:$0xf]
      %v234 = vld [vmem:[%s1 + $0x8] sm:$0xf]
      %v235 = vld [vmem:[%s1 + $0xc] sm:$0xf]
      %s236 = scalar_lea.vmem %s1, 16
      %v237 = vld [vmem:[%s236] sm:$0xf]
      %v238 = vld [vmem:[%s236 + $0x4] sm:$0xf]
      %v239 = vld [vmem:[%s236 + $0x8] sm:$0xf]
      %v240 = vld [vmem:[%s236 + $0xc] sm:$0xf]
      %v245 = vunpack.c.l.b16 %v237
      %v246 = vunpack.c.l.b16 %v238
      %v247 = vunpack.c.l.b16 %v239
      %v248 = vunpack.c.l.b16 %v240
      %v249 = vpack.c.b16 %v246, %v245
      %v250 = vpack.c.b16 %v248, %v247
      %253 = vrot.lane.b32.xlu0 %v230, 127
      %v254 = vpop.permute.xlu0 %253
      %255 = vrot.lane.b32.xlu0 %v231, 127
      %v256 = vpop.permute.xlu0 %255
      %vm259 = vcmask 261120
      %v261 = vsel %vm259, %v249, 0
      %v264 = vsel %vm259, %v250, 0
      %266 = vmatprep.subr.bf16.mxu0 0
      %267 = vmatpush1.bf16.msra.mxu0 0
      %268 = vmatprep.subr.bf16.mxu0 0
      %269 = vmatpush1.bf16.msra.mxu0 0
      %270 = vmatprep.subr.bf16.mxu0 0
      %271 = vmatpush1.bf16.msra.mxu0 0
      %272 = vmatprep.subr.bf16.mxu0 0
      %273 = vmatpush1.bf16.msra.mxu0 0
      %274 = vmatprep.subr.bf16.mxu0 0
      %275 = vmatpush1.bf16.msra.mxu0 0
      %276 = vmatprep.subr.bf16.mxu0 0
      %277 = vmatpush1.bf16.msra.mxu0 0
      %278 = vmatprep.subr.bf16.mxu0 0
      %279 = vmatpush1.bf16.msra.mxu0 %v256
      %280 = vmatprep.subr.bf16.mxu0 0
      %281 = vmatpush1.bf16.msra.mxu0 %v254
      %282 = vmatprep.subr.bf16.mxu0 0
      %283 = vmatpush2.bf16.msra.mxu0 0
      %284 = vmatprep.subr.bf16.mxu0 0
      %285 = vmatpush2.bf16.msra.mxu0 0
      %286 = vmatprep.subr.bf16.mxu0 0
      %287 = vmatpush2.bf16.msra.mxu0 0
      %288 = vmatprep.subr.bf16.mxu0 0
      %289 = vmatpush2.bf16.msra.mxu0 0
      %290 = vmatprep.subr.bf16.mxu0 0
      %291 = vmatpush2.bf16.msra.mxu0 0
      %292 = vmatprep.subr.bf16.mxu0 0
      %293 = vmatpush2.bf16.msra.mxu0 0
      %294 = vmatprep.subr.bf16.mxu0 0
      %295 = vmatpush2.bf16.msra.mxu0 0
      %296 = vmatprep.subr.bf16.mxu0 0
      %297 = vmatpush2.bf16.msra.mxu0 0
      %298 = vmatprep.mubr.bf16.mxu0 0
      %299 = vmatmul.mubr.bf16.gmra.mxu0 %v261
      %v300 = vpop.f32.mrf.mxu0
      %v301 = vadd.f32 0.0, %v300
      %v302 = vpop.f32.mrf.mxu0
      %v303 = vpop.f32.mrf.mxu0
      %v304 = vadd.f32 0.0, %v303
      %v305 = vpop.f32.mrf.mxu0
      %306 = vmatprep.mubr.bf16.mxu0 0
      %307 = vmatmul.mubr.bf16.gmra.mxu0 %v264
      %v308 = vpop.f32.mrf.mxu0
      %v309 = vadd.f32 0.0, %v308
      %v310 = vpop.f32.mrf.mxu0
      %v311 = vpop.f32.mrf.mxu0
      %v312 = vadd.f32 0.0, %v311
      %v313 = vpop.f32.mrf.mxu0
      %314 = vdwg.mxu0
      %v319 = vunpack.c.l.b16 %v232
      %v320 = vunpack.c.l.b16 %v233
      %v321 = vunpack.c.l.b16 %v234
      %v322 = vunpack.c.l.b16 %v235
      %v323 = vpack.c.b16 %v320, %v319
      %v324 = vpack.c.b16 %v322, %v321
      %v326 = vsel %vm259, %v323, 0
      %v329 = vsel %vm259, %v324, 0
      %331 = vmatprep.subr.bf16.mxu0 0
      %332 = vmatpush1.bf16.msra.mxu0 0
      %333 = vmatprep.subr.bf16.mxu0 0
      %334 = vmatpush1.bf16.msra.mxu0 0
      %335 = vmatprep.subr.bf16.mxu0 0
      %336 = vmatpush1.bf16.msra.mxu0 0
      %337 = vmatprep.subr.bf16.mxu0 0
      %338 = vmatpush1.bf16.msra.mxu0 0
      %339 = vmatprep.subr.bf16.mxu0 0
      %340 = vmatpush1.bf16.msra.mxu0 0
      %341 = vmatprep.subr.bf16.mxu0 0
      %342 = vmatpush1.bf16.msra.mxu0 0
      %343 = vmatprep.subr.bf16.mxu0 0
      %344 = vmatpush1.bf16.msra.mxu0 %v231
      %345 = vmatprep.subr.bf16.mxu0 0
      %346 = vmatpush1.bf16.msra.mxu0 %v230
      %347 = vmatprep.subr.bf16.mxu0 0
      %348 = vmatpush2.bf16.msra.mxu0 0
      %349 = vmatprep.subr.bf16.mxu0 0
      %350 = vmatpush2.bf16.msra.mxu0 0
      %351 = vmatprep.subr.bf16.mxu0 0
      %352 = vmatpush2.bf16.msra.mxu0 0
      %353 = vmatprep.subr.bf16.mxu0 0
      %354 = vmatpush2.bf16.msra.mxu0 0
      %355 = vmatprep.subr.bf16.mxu0 0
      %356 = vmatpush2.bf16.msra.mxu0 0
      %357 = vmatprep.subr.bf16.mxu0 0
      %358 = vmatpush2.bf16.msra.mxu0 0
      %359 = vmatprep.subr.bf16.mxu0 0
      %360 = vmatpush2.bf16.msra.mxu0 0
      %361 = vmatprep.subr.bf16.mxu0 0
      %362 = vmatpush2.bf16.msra.mxu0 0
      %363 = vmatprep.mubr.bf16.mxu0 0
      %364 = vmatmul.mubr.bf16.gmra.mxu0 %v326
      %v365 = vpop.f32.mrf.mxu0
      %v366 = vadd.f32 %v301, %v365
      %v367 = vpop.f32.mrf.mxu0
      %v368 = vpop.f32.mrf.mxu0
      %v369 = vadd.f32 %v304, %v368
      %v370 = vpop.f32.mrf.mxu0
      %371 = vmatprep.mubr.bf16.mxu0 0
      %372 = vmatmul.mubr.bf16.gmra.mxu0 %v329
      %v373 = vpop.f32.mrf.mxu0
      %v374 = vadd.f32 %v309, %v373
      %v375 = vpop.f32.mrf.mxu0
      %v376 = vpop.f32.mrf.mxu0
      %v377 = vadd.f32 %v312, %v376
      %v378 = vpop.f32.mrf.mxu0
      %379 = vdwg.mxu0
      %s380 = scalar_lea.vmem %s1, 32
      %v381 = vld [vmem:[%s380] sm:$0xf]
      %v382 = vld [vmem:[%s380 + $0x4] sm:$0xf]
      %v383 = vld [vmem:[%s380 + $0x8] sm:$0xf]
      %v384 = vld [vmem:[%s380 + $0xc] sm:$0xf]
      %v389 = vunpack.c.l.b16 %v381
      %v390 = vunpack.c.l.b16 %v382
      %v391 = vunpack.c.l.b16 %v383
      %v392 = vunpack.c.l.b16 %v384
      %v393 = vpack.c.b16 %v390, %v389
      %v394 = vpack.c.b16 %v392, %v391
      %395 = vrot.lane.b32.xlu0 %v230, 126
      %v396 = vpop.permute.xlu0 %395
      %397 = vrot.lane.b32.xlu0 %v231, 126
      %v398 = vpop.permute.xlu0 %397
      %v402 = vsel %vm259, %v393, 0
      %v405 = vsel %vm259, %v394, 0
      %407 = vmatprep.subr.bf16.mxu0 0
      %408 = vmatpush1.bf16.msra.mxu0 0
      %409 = vmatprep.subr.bf16.mxu0 0
      %410 = vmatpush1.bf16.msra.mxu0 0
      %411 = vmatprep.subr.bf16.mxu0 0
      %412 = vmatpush1.bf16.msra.mxu0 0
      %413 = vmatprep.subr.bf16.mxu0 0
      %414 = vmatpush1.bf16.msra.mxu0 0
      %415 = vmatprep.subr.bf16.mxu0 0
      %416 = vmatpush1.bf16.msra.mxu0 0
      %417 = vmatprep.subr.bf16.mxu0 0
      %418 = vmatpush1.bf16.msra.mxu0 0
      %419 = vmatprep.subr.bf16.mxu0 0
      %420 = vmatpush1.bf16.msra.mxu0 %v398
      %421 = vmatprep.subr.bf16.mxu0 0
      %422 = vmatpush1.bf16.msra.mxu0 %v396
      %423 = vmatprep.subr.bf16.mxu0 0
      %424 = vmatpush2.bf16.msra.mxu0 0
      %425 = vmatprep.subr.bf16.mxu0 0
      %426 = vmatpush2.bf16.msra.mxu0 0
      %427 = vmatprep.subr.bf16.mxu0 0
      %428 = vmatpush2.bf16.msra.mxu0 0
      %429 = vmatprep.subr.bf16.mxu0 0
      %430 = vmatpush2.bf16.msra.mxu0 0
      %431 = vmatprep.subr.bf16.mxu0 0
      %432 = vmatpush2.bf16.msra.mxu0 0
      %433 = vmatprep.subr.bf16.mxu0 0
      %434 = vmatpush2.bf16.msra.mxu0 0
      %435 = vmatprep.subr.bf16.mxu0 0
      %436 = vmatpush2.bf16.msra.mxu0 0
      %437 = vmatprep.subr.bf16.mxu0 0
      %438 = vmatpush2.bf16.msra.mxu0 0
      %439 = vmatprep.mubr.bf16.mxu0 0
      %440 = vmatmul.mubr.bf16.gmra.mxu0 %v402
      %v441 = vpop.f32.mrf.mxu0
      %v442 = vadd.f32 0.0, %v441
      %v443 = vpop.f32.mrf.mxu0
      %v444 = vpop.f32.mrf.mxu0
      %v445 = vadd.f32 0.0, %v444
      %v446 = vpop.f32.mrf.mxu0
      %447 = vmatprep.mubr.bf16.mxu0 0
      %448 = vmatmul.mubr.bf16.gmra.mxu0 %v405
      %v449 = vpop.f32.mrf.mxu0
      %v450 = vadd.f32 0.0, %v449
      %v451 = vpop.f32.mrf.mxu0
      %v452 = vpop.f32.mrf.mxu0
      %v453 = vadd.f32 0.0, %v452
      %v454 = vpop.f32.mrf.mxu0
      %455 = vdwg.mxu0
      %v456 = vadd.f32 %v366, %v442
      %v457 = vadd.f32 %v369, %v445
      %v458 = vadd.f32 %v374, %v450
      %v459 = vadd.f32 %v377, %v453
      %v460 = vld [vmem:[%s2] sm:$0xff]
      %v461 = vld [vmem:[%s2 + $0x8] sm:$0xff]
      %v462 = vld [vmem:[%s2 + $0x10] sm:$0xff]
      %v463 = vld [vmem:[%s2 + $0x18] sm:$0xff]
      %465 = vset.pattern.permute.xlu0 0
      %466 = vperm.xlu0 %465, %v460
      %v467 = vpop.permute.xlu0 %466
      %470 = vset.pattern.permute.xlu0 0
      %471 = vperm.xlu0 %470, %v461
      %v472 = vpop.permute.xlu0 %471
      %475 = vset.pattern.permute.xlu0 0
      %476 = vperm.xlu0 %475, %v462
      %v477 = vpop.permute.xlu0 %476
      %480 = vset.pattern.permute.xlu0 0
      %481 = vperm.xlu0 %480, %v463
      %v482 = vpop.permute.xlu0 %481
      %v484 = vadd.f32 %v456, %v467
      %v485 = vadd.f32 %v457, %v472
      %v486 = vadd.f32 %v458, %v477
      %v487 = vadd.f32 %v459, %v482
      %v488 = vmax.f32 %v484, 0.0
      %v489 = vmax.f32 %v485, 0.0
      %v490 = vmax.f32 %v486, 0.0
      %v491 = vmax.f32 %v487, 0.0
      %v492 = vld [vmem:[%s3] sm:$0xf]
      %v493 = vld [vmem:[%s3 + $0x4] sm:$0xf]
      %v494 = vld [vmem:[%s3 + $0x8] sm:$0xf]
      %v495 = vld [vmem:[%s3 + $0xc] sm:$0xf]
      %v496 = vpack.c.bf16 %v489, %v488
      %v497 = vpack.c.bf16 %v491, %v490
      %v498 = vld [vmem:[%s4] sm:$0xff]
      %v499 = vld [vmem:[%s4 + $0x8] sm:$0xff]
      %v500 = vld [vmem:[%s4 + $0x10] sm:$0xff]
      %v501 = vld [vmem:[%s4 + $0x18] sm:$0xff]
      %503 = vset.pattern.permute.xlu0 0
      %504 = vperm.xlu0 %503, %v498
      %v505 = vpop.permute.xlu0 %504
      %508 = vset.pattern.permute.xlu0 0
      %509 = vperm.xlu0 %508, %v499
      %v510 = vpop.permute.xlu0 %509
      %513 = vset.pattern.permute.xlu0 0
      %514 = vperm.xlu0 %513, %v500
      %v515 = vpop.permute.xlu0 %514
      %518 = vset.pattern.permute.xlu0 0
      %519 = vperm.xlu0 %518, %v501
      %v520 = vpop.permute.xlu0 %519
      %v526 = vunpack.c.l.b16 %v492
      %v527 = vunpack.c.l.b16 %v493
      %v528 = vunpack.c.l.b16 %v494
      %v529 = vunpack.c.l.b16 %v495
      %v530 = vpack.c.b16 %v527, %v526
      %v531 = vpack.c.b16 %v529, %v528
      %v533 = vsel %vm259, %v530, 0
      %v536 = vsel %vm259, %v531, 0
      %538 = vmatprep.subr.bf16.mxu0 0
      %539 = vmatpush1.bf16.msra.mxu0 0
      %540 = vmatprep.subr.bf16.mxu0 0
      %541 = vmatpush1.bf16.msra.mxu0 0
      %542 = vmatprep.subr.bf16.mxu0 0
      %543 = vmatpush1.bf16.msra.mxu0 0
      %544 = vmatprep.subr.bf16.mxu0 0
      %545 = vmatpush1.bf16.msra.mxu0 0
      %546 = vmatprep.subr.bf16.mxu0 0
      %547 = vmatpush1.bf16.msra.mxu0 0
      %548 = vmatprep.subr.bf16.mxu0 0
      %549 = vmatpush1.bf16.msra.mxu0 0
      %550 = vmatprep.subr.bf16.mxu0 0
      %551 = vmatpush1.bf16.msra.mxu0 %v497
      %552 = vmatprep.subr.bf16.mxu0 0
      %553 = vmatpush1.bf16.msra.mxu0 %v496
      %554 = vmatprep.subr.bf16.mxu0 0
      %555 = vmatpush2.bf16.msra.mxu0 0
      %556 = vmatprep.subr.bf16.mxu0 0
      %557 = vmatpush2.bf16.msra.mxu0 0
      %558 = vmatprep.subr.bf16.mxu0 0
      %559 = vmatpush2.bf16.msra.mxu0 0
      %560 = vmatprep.subr.bf16.mxu0 0
      %561 = vmatpush2.bf16.msra.mxu0 0
      %562 = vmatprep.subr.bf16.mxu0 0
      %563 = vmatpush2.bf16.msra.mxu0 0
      %564 = vmatprep.subr.bf16.mxu0 0
      %565 = vmatpush2.bf16.msra.mxu0 0
      %566 = vmatprep.subr.bf16.mxu0 0
      %567 = vmatpush2.bf16.msra.mxu0 0
      %568 = vmatprep.subr.bf16.mxu0 0
      %569 = vmatpush2.bf16.msra.mxu0 0
      %570 = vmatprep.mubr.bf16.mxu0 0
      %571 = vmatmul.mubr.bf16.gmra.mxu0 %v533
      %v572 = vpop.f32.mrf.mxu0
      %v573 = vadd.f32 %v505, %v572
      %v574 = vpop.f32.mrf.mxu0
      %v575 = vpop.f32.mrf.mxu0
      %v576 = vadd.f32 %v510, %v575
      %v577 = vpop.f32.mrf.mxu0
      %578 = vmatprep.mubr.bf16.mxu0 0
      %579 = vmatmul.mubr.bf16.gmra.mxu0 %v536
      %v580 = vpop.f32.mrf.mxu0
      %v581 = vadd.f32 %v515, %v580
      %v582 = vpop.f32.mrf.mxu0
      %v583 = vpop.f32.mrf.mxu0
      %v584 = vadd.f32 %v520, %v583
      %v585 = vpop.f32.mrf.mxu0
      %586 = vdwg.mxu0
      %591 = vrot.lane.b32.xlu0 %v226, 127
      %v592 = vpop.permute.xlu0 %591
      %593 = vrot.lane.b32.xlu0 %v227, 127
      %v594 = vpop.permute.xlu0 %593
      %595 = vrot.lane.b32.xlu0 %v228, 127
      %v596 = vpop.permute.xlu0 %595
      %597 = vrot.lane.b32.xlu0 %v229, 127
      %v598 = vpop.permute.xlu0 %597
      %v603 = vadd.f32 %v573, %v592
      %v604 = vadd.f32 %v576, %v594
      %v605 = vadd.f32 %v581, %v596
      %v606 = vadd.f32 %v584, %v598
      %vm607 = vcmask 130048
      %608 = vst.msk [vmem:[%s224] sm:$0xff] %vm607, %v603
      %609 = vst.msk [vmem:[%s224 + $0x8] sm:$0xff] %vm607, %v604
      %610 = vst.msk [vmem:[%s224 + $0x10] sm:$0xff] %vm607, %v605
      %611 = vst.msk [vmem:[%s224 + $0x18] sm:$0xff] %vm607, %v606
      %p612 = scmp.lt.s32.totalorder %s16, 1
      %s613 = scalar_select %p612, %s16, 1
      %s614 = smul.addr %s613, 4
      %s615 = smul.addr %s614, 8
      %s616 = scalar_lea.vmem %s5, %s615
      // Predicated region
      $region41: #{tpu_custom_call.1} parent=39 // pred_check
        %p617 = pneg %p144
      $region42: #{tpu_custom_call.1} parent=39 // pred_check_branch
        %619 = sbr.rel (%p617) target = $region44
      $region43: #{tpu_custom_call.1} parent=39 // pred_region
        _
      $region44: #{tpu_custom_call.1} parent=39 // pred_fallthru
        _
    $region40: #{tpu_custom_call.1} parent=5 // pred_fallthru
      _
    %p620 = scmp.le.s32.totalorder 2, %s11
    // Predicated region
    $region45: #{tpu_custom_call.1} parent=5 // pred_check
      %p621 = pneg %p620
    $region46: #{tpu_custom_call.1} parent=5 // pred_check_branch
      %623 = sbr.rel (%p621) target = $region48
    $region47: #{tpu_custom_call.1} parent=5 // pred_region
      %s624 = ssub.s32 %s11, 2
      // Predicated region
      $region49: #{tpu_custom_call.1} parent=47 // pred_check
        %p625 = pneg %p150
      $region50: #{tpu_custom_call.1} parent=47 // pred_check_branch
        %627 = sbr.rel (%p625) target = $region52
      $region51: #{tpu_custom_call.1} parent=47 // pred_region
        %p628 = scmp.lt.s32.totalorder %s17, 1
        %s629 = scalar_select %p628, %s17, 1
        %s630 = smul.addr %s629, 4
        %s631 = smul.addr %s630, 8
        %s632 = scalar_lea.vmem %s5, %s631
      $region52: #{tpu_custom_call.1} parent=47 // pred_fallthru
        _
    $region48: #{tpu_custom_call.1} parent=5 // pred_fallthru
      _
  $region6: #{tpu_custom_call.1} parent=0 // loop_footer
    %s15 = sadd.s32 1, %s11
  $region7: #{tpu_custom_call.1} parent=0 // loop_footer_branch
    %10 = sbr.rel target = $region3
  $region8: #{tpu_custom_call.1} parent=0 // loop_exit
    _

</llo_original>
